<compile_context>
chip_gen: v6e
topology: v6e:2x2x1
jax: 0.10.0
libtpu: 0.0.40
codegen_flags: <defaults>
</compile_context>

<pallas_src>
import jax
import jax.numpy as jnp
from jax import lax
from jax.experimental import pallas as pl
from jax.experimental.pallas import tpu as pltpu


def _conv3x3_same(x, w_flat):
    """3x3 'same' conv (zero pad) via im2col + a single MXU matmul.

    x:      (H, W, C)  f32 activation held in values (no VMEM round trip)
    w_flat: (9*C, Co)  weights flattened as row index (ky*3 + kx)*C + c
    returns (H*W, Co)  f32
    """
    H, W, C = x.shape
    # Zero-pad spatially as values (leading-dim concat + sublane-dim concat).
    zr = jnp.zeros((1, W, C), x.dtype)
    xp = jnp.concatenate([zr, x, zr], axis=0)          # (H+2, W, C)
    zc = jnp.zeros((H + 2, 1, C), x.dtype)
    xp = jnp.concatenate([zc, xp, zc], axis=1)         # (H+2, W+2, C)
    # im2col: 9 shifted windows concatenated along the channel (lane) axis.
    taps = [xp[dy:dy + H, dx:dx + W, :]                # 9 x (H, W, C)
            for dy in range(3) for dx in range(3)]
    patches = jnp.concatenate(taps, axis=-1)           # (H, W, 9*C)
    # Merge (H, W) into the sublane axis; layout-preserving for W % 8 == 0.
    patches = patches.reshape(H * W, 9 * C)            # (H*W, 9*C)
    # One matmul per conv: K = 9*C, accumulation inside the MXU.
    return jnp.dot(patches, w_flat, preferred_element_type=jnp.float32)


def down_kernel(x_ref, w1_ref, b1_ref, w2_ref, b2_ref, o_ref):
    # x_ref:  (1, H, W/2, 2*Cin)  input with W-pairs packed on the lane dim
    # w1_ref: (9*Cin,  Cmid)      conv1 taps, BN1 scale pre-folded
    # b1_ref: (1, Cmid)           folded BN1 bias
    # w2_ref: (9*Cmid, Cout)      conv2 taps, BN2 scale pre-folded
    # b2_ref: (1, Cout)           folded BN2 bias
    # o_ref:  (1, Hh*Wh, Cout)
    _, H, Wh, C2 = x_ref.shape
    Cin = C2 // 2
    Hh = H // 2
    Cmid = w1_ref.shape[1]

    # ---- MaxPool2d(2) ----
    x = x_ref[0]                                        # (H, Wh, 2*Cin)
    xw = jnp.maximum(x[:, :, :Cin], x[:, :, Cin:])      # pool over W pairs
    xw = xw.reshape(Hh, 2, Wh, Cin)                     # split leading dim
    pooled = jnp.maximum(xw[:, 0], xw[:, 1])            # (Hh, Wh, Cin)

    # ---- Conv1 (BN1 scale folded into weights) + bias + ReLU ----
    a1 = _conv3x3_same(pooled, w1_ref[...])             # (Hh*Wh, Cmid)
    h1 = jnp.maximum(a1 + b1_ref[...], 0.0)
    h1 = h1.reshape(Hh, Wh, Cmid)                       # split sublanes (safe)

    # ---- Conv2 (BN2 scale folded into weights) + bias + ReLU ----
    a2 = _conv3x3_same(h1, w2_ref[...])                 # (Hh*Wh, Cout)
    h2 = jnp.maximum(a2 + b2_ref[...], 0.0)

    o_ref[0] = h2.astype(o_ref.dtype)


@jax.jit
def down(x_nhwc, w1, g1, be1, m1, v1, w2, g2, be2, m2, v2, eps=1e-5):
    """x_nhwc: (N,H,W,Cin); w1: (3,3,Cin,Cmid) HWIO; w2: (3,3,Cmid,Cout) HWIO.

    Returns the Down(MaxPool2d(2) -> DoubleConv) output in NHWC:
    (N, H//2, W//2, Cout).  BatchNorm is eval-mode (running stats folded).
    """
    N, H, W, Cin = x_nhwc.shape
    Cmid = w1.shape[-1]
    Cout = w2.shape[-1]
    Hh, Wh = H // 2, W // 2

    # Fold BatchNorm (eval mode) into the conv weights + a per-channel bias.
    s1 = g1 / jnp.sqrt(v1 + eps)
    b1 = (be1 - m1 * s1).reshape(1, Cmid)
    s2 = g2 / jnp.sqrt(v2 + eps)
    b2 = (be2 - m2 * s2).reshape(1, Cout)
    w1f = (w1 * s1[None, None, None, :]).reshape(9 * Cin, Cmid)
    w2f = (w2 * s2[None, None, None, :]).reshape(9 * Cmid, Cout)

    # Free metadata reshape: pack W-pairs onto the lane dim so the maxpool is
    # two elementwise maxes inside the kernel (no strided loads, no jnp.pad).
    x_packed = x_nhwc.reshape(N, H, Wh, 2 * Cin)

    out = pl.pallas_call(
        down_kernel,
        out_shape=jax.ShapeDtypeStruct((N, Hh * Wh, Cout), x_nhwc.dtype),
        grid_spec=pltpu.PrefetchScalarGridSpec(
            num_scalar_prefetch=0,
            grid=(N,),
            in_specs=[
                pl.BlockSpec((1, H, Wh, 2 * Cin), lambda n: (n, 0, 0, 0)),
                pl.BlockSpec((9 * Cin, Cmid), lambda n: (0, 0)),
                pl.BlockSpec((1, Cmid), lambda n: (0, 0)),
                pl.BlockSpec((9 * Cmid, Cout), lambda n: (0, 0)),
                pl.BlockSpec((1, Cout), lambda n: (0, 0)),
            ],
            out_specs=pl.BlockSpec((1, Hh * Wh, Cout), lambda n: (n, 0, 0)),
        ),
        compiler_params=pltpu.CompilerParams(
            dimension_semantics=("parallel",),
            vmem_limit_bytes=32 * 1024 * 1024),
    )(x_packed, w1f, b1, w2f, b2)

    return out.reshape(N, Hh, Wh, Cout)


def reference(x_nhwc, w1, g1, be1, m1, v1, w2, g2, be2, m2, v2, eps=1e-5):
    """Pure-JAX reference: MaxPool2d(2) -> Conv/BN/ReLU -> Conv/BN/ReLU (NHWC)."""
    N, H, W, C = x_nhwc.shape
    p = x_nhwc.reshape(N, H // 2, 2, W // 2, 2, C).max(axis=(2, 4))
    dn1 = lax.conv_dimension_numbers(p.shape, w1.shape, ('NHWC', 'HWIO', 'NHWC'))
    y = lax.conv_general_dilated(p, w1, (1, 1), 'SAME', dimension_numbers=dn1)
    y = (y - m1) / jnp.sqrt(v1 + eps) * g1 + be1
    y = jnp.maximum(y, 0.0)
    dn2 = lax.conv_dimension_numbers(y.shape, w2.shape, ('NHWC', 'HWIO', 'NHWC'))
    y = lax.conv_general_dilated(y, w2, (1, 1), 'SAME', dimension_numbers=dn2)
    y = (y - m2) / jnp.sqrt(v2 + eps) * g2 + be2
    return jnp.maximum(y, 0.0)


if __name__ == "__main__":
    # Down(in_channels=4, out_channels=8) on a (2, 4, 16, 16) NCHW input,
    # expressed here in NHWC: (2, 16, 16, 4).
    N, Cin, Cout, H, W = 2, 4, 8, 16, 16
    Cmid = Cout
    key = jax.random.PRNGKey(0)
    ks = jax.random.split(key, 8)

    x = jax.random.normal(ks[0], (N, H, W, Cin), jnp.float32)              # NHWC
    w1 = jax.random.normal(ks[1], (3, 3, Cin, Cmid), jnp.float32) * 0.1    # HWIO
    w2 = jax.random.normal(ks[2], (3, 3, Cmid, Cout), jnp.float32) * 0.1
    g1 = 1.0 + 0.1 * jax.random.normal(ks[3], (Cmid,), jnp.float32)
    be1 = 0.1 * jax.random.normal(ks[4], (Cmid,), jnp.float32)
    m1 = 0.05 * jax.random.normal(ks[5], (Cmid,), jnp.float32)
    v1 = jnp.abs(1.0 + 0.1 * jax.random.normal(ks[6], (Cmid,), jnp.float32))
    g2 = 1.0 + 0.1 * jax.random.normal(ks[7], (Cout,), jnp.float32)
    be2 = jnp.linspace(-0.1, 0.1, Cout, dtype=jnp.float32)
    m2 = jnp.linspace(-0.05, 0.05, Cout, dtype=jnp.float32)
    v2 = jnp.linspace(0.9, 1.1, Cout, dtype=jnp.float32)

    out = down(x, w1, g1, be1, m1, v1, w2, g2, be2, m2, v2)
    out = jax.block_until_ready(out)

    ref = reference(x, w1, g1, be1, m1, v1, w2, g2, be2, m2, v2)
    assert out.shape == (N, H // 2, W // 2, Cout), out.shape
    err = float(jnp.max(jnp.abs(out - ref)))
    assert err < 1e-4, err
    print("KERNEL_OK")
</pallas_src>

<mosaic_0001>
module attributes {stable_mosaic.version = 11 : i64} {
  func.func @down_kernel(%arg0: i32, %arg1: memref<1x16x8x8xf32, #tpu.memory_space<vmem>>, %arg2: memref<36x8xf32, #tpu.memory_space<vmem>>, %arg3: memref<1x8xf32, #tpu.memory_space<vmem>>, %arg4: memref<72x8xf32, #tpu.memory_space<vmem>>, %arg5: memref<1x8xf32, #tpu.memory_space<vmem>>, %arg6: memref<1x64x8xf32, #tpu.memory_space<vmem>>) attributes {dimension_semantics = [#tpu.dimension_semantics<parallel>], iteration_bounds = array<i64: 2>, scalar_prefetch = 0 : i64, scratch_operands = 0 : i64, tpu.core_type = #tpu.core_type<tc>, window_params = [{transform_indices = @transform_0, window_bounds = array<i64: 1, 16, 8, 8>}, {pipeline_mode = #tpu.pipeline_mode<synchronous>, transform_indices = @transform_1, window_bounds = array<i64: 36, 8>}, {pipeline_mode = #tpu.pipeline_mode<synchronous>, transform_indices = @transform_2, window_bounds = array<i64: 1, 8>}, {pipeline_mode = #tpu.pipeline_mode<synchronous>, transform_indices = @transform_3, window_bounds = array<i64: 72, 8>}, {pipeline_mode = #tpu.pipeline_mode<synchronous>, transform_indices = @transform_4, window_bounds = array<i64: 1, 8>}, {transform_indices = @transform_5, window_bounds = array<i64: 1, 64, 8>}]} {
    %c0 = arith.constant 0 : index
    %c0_0 = arith.constant 0 : index
    %c0_1 = arith.constant 0 : index
    %c0_2 = arith.constant 0 : index
    %0 = vector.load %arg1[%c0, %c0_0, %c0_1, %c0_2] : memref<1x16x8x8xf32, #tpu.memory_space<vmem>>, vector<1x16x8x8xf32>
    %1 = vector.shape_cast %0 : vector<1x16x8x8xf32> to vector<16x8x8xf32>
    %2 = vector.extract_strided_slice %1 {offsets = [0, 0, 0], sizes = [16, 8, 4], strides = [1, 1, 1]} : vector<16x8x8xf32> to vector<16x8x4xf32>
    %3 = vector.extract_strided_slice %1 {offsets = [0, 0, 4], sizes = [16, 8, 4], strides = [1, 1, 1]} : vector<16x8x8xf32> to vector<16x8x4xf32>
    %4 = arith.maximumf %2, %3 : vector<16x8x4xf32>
    %5 = vector.shape_cast %4 : vector<16x8x4xf32> to vector<8x2x8x4xf32>
    %6 = vector.extract_strided_slice %5 {offsets = [0, 0, 0, 0], sizes = [8, 1, 8, 4], strides = [1, 1, 1, 1]} : vector<8x2x8x4xf32> to vector<8x1x8x4xf32>
    %7 = vector.shape_cast %6 : vector<8x1x8x4xf32> to vector<8x8x4xf32>
    %8 = vector.extract_strided_slice %5 {offsets = [0, 1, 0, 0], sizes = [8, 1, 8, 4], strides = [1, 1, 1, 1]} : vector<8x2x8x4xf32> to vector<8x1x8x4xf32>
    %9 = vector.shape_cast %8 : vector<8x1x8x4xf32> to vector<8x8x4xf32>
    %10 = arith.maximumf %7, %9 : vector<8x8x4xf32>
    %c0_3 = arith.constant 0 : index
    %c0_4 = arith.constant 0 : index
    %11 = vector.load %arg2[%c0_3, %c0_4] : memref<36x8xf32, #tpu.memory_space<vmem>>, vector<36x8xf32>
    %cst = arith.constant 0.000000e+00 : f32
    %12 = vector.broadcast %cst : f32 to vector<1x8x4xf32>
    %13 = tpu.concatenate %12, %10, %12 in 0 : vector<1x8x4xf32>, vector<8x8x4xf32>, vector<1x8x4xf32> -> vector<10x8x4xf32>
    %cst_5 = arith.constant 0.000000e+00 : f32
    %14 = vector.broadcast %cst_5 : f32 to vector<10x1x4xf32>
    %15 = tpu.concatenate %14, %13, %14 in 1 : vector<10x1x4xf32>, vector<10x8x4xf32>, vector<10x1x4xf32> -> vector<10x10x4xf32>
    %16 = vector.extract_strided_slice %15 {offsets = [0, 0, 0], sizes = [8, 8, 4], strides = [1, 1, 1]} : vector<10x10x4xf32> to vector<8x8x4xf32>
    %17 = vector.extract_strided_slice %15 {offsets = [0, 1, 0], sizes = [8, 8, 4], strides = [1, 1, 1]} : vector<10x10x4xf32> to vector<8x8x4xf32>
    %18 = vector.extract_strided_slice %15 {offsets = [0, 2, 0], sizes = [8, 8, 4], strides = [1, 1, 1]} : vector<10x10x4xf32> to vector<8x8x4xf32>
    %19 = vector.extract_strided_slice %15 {offsets = [1, 0, 0], sizes = [8, 8, 4], strides = [1, 1, 1]} : vector<10x10x4xf32> to vector<8x8x4xf32>
    %20 = vector.extract_strided_slice %15 {offsets = [1, 1, 0], sizes = [8, 8, 4], strides = [1, 1, 1]} : vector<10x10x4xf32> to vector<8x8x4xf32>
    %21 = vector.extract_strided_slice %15 {offsets = [1, 2, 0], sizes = [8, 8, 4], strides = [1, 1, 1]} : vector<10x10x4xf32> to vector<8x8x4xf32>
    %22 = vector.extract_strided_slice %15 {offsets = [2, 0, 0], sizes = [8, 8, 4], strides = [1, 1, 1]} : vector<10x10x4xf32> to vector<8x8x4xf32>
    %23 = vector.extract_strided_slice %15 {offsets = [2, 1, 0], sizes = [8, 8, 4], strides = [1, 1, 1]} : vector<10x10x4xf32> to vector<8x8x4xf32>
    %24 = vector.extract_strided_slice %15 {offsets = [2, 2, 0], sizes = [8, 8, 4], strides = [1, 1, 1]} : vector<10x10x4xf32> to vector<8x8x4xf32>
    %25 = tpu.concatenate %16, %17, %18, %19, %20, %21, %22, %23, %24 in 2 : vector<8x8x4xf32>, vector<8x8x4xf32>, vector<8x8x4xf32>, vector<8x8x4xf32>, vector<8x8x4xf32>, vector<8x8x4xf32>, vector<8x8x4xf32>, vector<8x8x4xf32>, vector<8x8x4xf32> -> vector<8x8x36xf32>
    %26 = vector.shape_cast %25 : vector<8x8x36xf32> to vector<64x36xf32>
    %cst_6 = arith.constant dense<0.000000e+00> : vector<64x8xf32>
    %27 = tpu.matmul %26, %11, %cst_6 {dimension_numbers = #tpu.dot_dimension_numbers<[1], [0], [0], [1], [0, 0, 1, 1], [], []>} : vector<64x36xf32>, vector<36x8xf32>, vector<64x8xf32> -> vector<64x8xf32>
    %c0_7 = arith.constant 0 : index
    %c0_8 = arith.constant 0 : index
    %28 = vector.load %arg3[%c0_7, %c0_8] : memref<1x8xf32, #tpu.memory_space<vmem>>, vector<1x8xf32>
    %29 = vector.broadcast %28 : vector<1x8xf32> to vector<64x8xf32>
    %30 = arith.addf %27, %29 : vector<64x8xf32>
    %cst_9 = arith.constant 0.000000e+00 : f32
    %31 = vector.broadcast %cst_9 : f32 to vector<64x8xf32>
    %32 = arith.maximumf %30, %31 : vector<64x8xf32>
    %33 = vector.shape_cast %32 : vector<64x8xf32> to vector<8x8x8xf32>
    %c0_10 = arith.constant 0 : index
    %c0_11 = arith.constant 0 : index
    %34 = vector.load %arg4[%c0_10, %c0_11] : memref<72x8xf32, #tpu.memory_space<vmem>>, vector<72x8xf32>
    %cst_12 = arith.constant 0.000000e+00 : f32
    %35 = vector.broadcast %cst_12 : f32 to vector<1x8x8xf32>
    %36 = tpu.concatenate %35, %33, %35 in 0 : vector<1x8x8xf32>, vector<8x8x8xf32>, vector<1x8x8xf32> -> vector<10x8x8xf32>
    %cst_13 = arith.constant 0.000000e+00 : f32
    %37 = vector.broadcast %cst_13 : f32 to vector<10x1x8xf32>
    %38 = tpu.concatenate %37, %36, %37 in 1 : vector<10x1x8xf32>, vector<10x8x8xf32>, vector<10x1x8xf32> -> vector<10x10x8xf32>
    %39 = vector.extract_strided_slice %38 {offsets = [0, 0, 0], sizes = [8, 8, 8], strides = [1, 1, 1]} : vector<10x10x8xf32> to vector<8x8x8xf32>
    %40 = vector.extract_strided_slice %38 {offsets = [0, 1, 0], sizes = [8, 8, 8], strides = [1, 1, 1]} : vector<10x10x8xf32> to vector<8x8x8xf32>
    %41 = vector.extract_strided_slice %38 {offsets = [0, 2, 0], sizes = [8, 8, 8], strides = [1, 1, 1]} : vector<10x10x8xf32> to vector<8x8x8xf32>
    %42 = vector.extract_strided_slice %38 {offsets = [1, 0, 0], sizes = [8, 8, 8], strides = [1, 1, 1]} : vector<10x10x8xf32> to vector<8x8x8xf32>
    %43 = vector.extract_strided_slice %38 {offsets = [1, 1, 0], sizes = [8, 8, 8], strides = [1, 1, 1]} : vector<10x10x8xf32> to vector<8x8x8xf32>
    %44 = vector.extract_strided_slice %38 {offsets = [1, 2, 0], sizes = [8, 8, 8], strides = [1, 1, 1]} : vector<10x10x8xf32> to vector<8x8x8xf32>
    %45 = vector.extract_strided_slice %38 {offsets = [2, 0, 0], sizes = [8, 8, 8], strides = [1, 1, 1]} : vector<10x10x8xf32> to vector<8x8x8xf32>
    %46 = vector.extract_strided_slice %38 {offsets = [2, 1, 0], sizes = [8, 8, 8], strides = [1, 1, 1]} : vector<10x10x8xf32> to vector<8x8x8xf32>
    %47 = vector.extract_strided_slice %38 {offsets = [2, 2, 0], sizes = [8, 8, 8], strides = [1, 1, 1]} : vector<10x10x8xf32> to vector<8x8x8xf32>
    %48 = tpu.concatenate %39, %40, %41, %42, %43, %44, %45, %46, %47 in 2 : vector<8x8x8xf32>, vector<8x8x8xf32>, vector<8x8x8xf32>, vector<8x8x8xf32>, vector<8x8x8xf32>, vector<8x8x8xf32>, vector<8x8x8xf32>, vector<8x8x8xf32>, vector<8x8x8xf32> -> vector<8x8x72xf32>
    %49 = vector.shape_cast %48 : vector<8x8x72xf32> to vector<64x72xf32>
    %cst_14 = arith.constant dense<0.000000e+00> : vector<64x8xf32>
    %50 = tpu.matmul %49, %34, %cst_14 {dimension_numbers = #tpu.dot_dimension_numbers<[1], [0], [0], [1], [0, 0, 1, 1], [], []>} : vector<64x72xf32>, vector<72x8xf32>, vector<64x8xf32> -> vector<64x8xf32>
    %c0_15 = arith.constant 0 : index
    %c0_16 = arith.constant 0 : index
    %51 = vector.load %arg5[%c0_15, %c0_16] : memref<1x8xf32, #tpu.memory_space<vmem>>, vector<1x8xf32>
    %52 = vector.broadcast %51 : vector<1x8xf32> to vector<64x8xf32>
    %53 = arith.addf %50, %52 : vector<64x8xf32>
    %cst_17 = arith.constant 0.000000e+00 : f32
    %54 = vector.broadcast %cst_17 : f32 to vector<64x8xf32>
    %55 = arith.maximumf %53, %54 : vector<64x8xf32>
    %c0_18 = arith.constant 0 : index
    %c0_19 = arith.constant 0 : index
    %c0_20 = arith.constant 0 : index
    %56 = vector.load %arg6[%c0_18, %c0_19, %c0_20] : memref<1x64x8xf32, #tpu.memory_space<vmem>>, vector<1x64x8xf32>
    %57 = vector.shape_cast %56 : vector<1x64x8xf32> to vector<64x8xf32>
    %58 = vector.shape_cast %55 : vector<64x8xf32> to vector<1x64x8xf32>
    tpu.vector_store %arg6[%c0_18, %c0_19, %c0_20], %58 {strides = array<i32>} : memref<1x64x8xf32, #tpu.memory_space<vmem>>, vector<1x64x8xf32>,
    return
  }
  func.func @transform_0(%arg0: i32) -> (i32, i32, i32, i32) {
    %c0_i32 = arith.constant 0 : i32
    %c0_i32_0 = arith.constant 0 : i32
    %c0_i32_1 = arith.constant 0 : i32
    %c0_i32_2 = arith.constant 0 : i32
    return %arg0, %c0_i32, %c0_i32_0, %c0_i32_1 : i32, i32, i32, i32
  }
  func.func @transform_1(%arg0: i32) -> (i32, i32) {
    %c0_i32 = arith.constant 0 : i32
    %c0_i32_0 = arith.constant 0 : i32
    %c0_i32_1 = arith.constant 0 : i32
    return %c0_i32, %c0_i32_0 : i32, i32
  }
  func.func @transform_2(%arg0: i32) -> (i32, i32) {
    %c0_i32 = arith.constant 0 : i32
    %c0_i32_0 = arith.constant 0 : i32
    %c0_i32_1 = arith.constant 0 : i32
    return %c0_i32, %c0_i32_0 : i32, i32
  }
  func.func @transform_3(%arg0: i32) -> (i32, i32) {
    %c0_i32 = arith.constant 0 : i32
    %c0_i32_0 = arith.constant 0 : i32
    %c0_i32_1 = arith.constant 0 : i32
    return %c0_i32, %c0_i32_0 : i32, i32
  }
  func.func @transform_4(%arg0: i32) -> (i32, i32) {
    %c0_i32 = arith.constant 0 : i32
    %c0_i32_0 = arith.constant 0 : i32
    %c0_i32_1 = arith.constant 0 : i32
    return %c0_i32, %c0_i32_0 : i32, i32
  }
  func.func @transform_5(%arg0: i32) -> (i32, i32, i32) {
    %c0_i32 = arith.constant 0 : i32
    %c0_i32_0 = arith.constant 0 : i32
    %c0_i32_1 = arith.constant 0 : i32
    return %arg0, %c0_i32, %c0_i32_0 : i32, i32, i32
  }
}

</mosaic_0001>

<llo_original>
// kernel: down.1
$region0: #{down.1}
  #allocation0 [shape = 'u32[]', space=smem, size = 0x4, offset = 0x4, fixed_abs, tag = 'smem constant byte address 0x4 - core index']
  #allocation1 [shape = 'u32[144,128]{1,0:T(1,128)}', space=vmem, size = 0x12000, scoped, tag = 'internal scratch']
  %s0 = inlined_call_operand.vmem [shape: f32[2,16,8,8], index: 0, kind: input, shape index: {}]
  %s1 = inlined_call_operand.vmem [shape: f32[36,8], index: 1, kind: input, shape index: {}]
  %s2 = inlined_call_operand.vmem [shape: f32[1,8], index: 2, kind: input, shape index: {}]
  %s3 = inlined_call_operand.vmem [shape: f32[72,8], index: 3, kind: input, shape index: {}]
  %s4 = inlined_call_operand.vmem [shape: f32[1,8], index: 4, kind: input, shape index: {}]
  %s5 = inlined_call_operand.hbm [shape: f32[2,64,8], index: 5, kind: output, shape index: {}]
  %s6 = sld [smem:[#allocation0]]
  $region53: #{down.1} parent=0
    _
  %s8 = ssub.s32 1, %s6
  %s9 = scalar_select 0, %s8, %s6
  $region1: #{down.1} parent=0
    #allocation2 [shape = 'u8[65536]{0}', space=vmem, size = 0x10000, scoped, tag = 'output window, operand 0']
    #allocation3 [shape = 's32[2]{0}', space=sflag, size = 0x8, scoped, tag = 'scoped memory for down.1']
    %10 = vsyncpa [#allocation3], 0
    %s11 = scalar_lea.sflag [#allocation3], 1
    %12 = vsyncpa %s11, 0
    loop: start=0, step=1, limit=4
    $region2: #{down.1} parent=1 // loop_pre_header
      _
    $region3: #{down.1} parent=1 // loop_header
      %s14 = sphi 0, %s18
      %p15 = scmp.ge.s32.totalorder %s14, 4
      %s24 = sphi 0, %s26
      %s27 = sphi 0, %s24
      %s28 = sphi 0, %s27
      %s44 = sphi 0, %s28
      %s48 = sphi 0, %s48
      %s50 = sphi 0, %s48
      %s51 = sphi 0, %s50
      %s65 = sphi 0, %s51
      %s69 = sphi 0, %s69
      %s71 = sphi 0, %s69
      %s72 = sphi 0, %s71
      %s86 = sphi 0, %s72
      %s90 = sphi 0, %s90
      %s92 = sphi 0, %s90
      %s93 = sphi 0, %s92
      %s107 = sphi 0, %s93
      %s111 = sphi 0, %s111
      %s113 = sphi 0, %s111
      %s114 = sphi 0, %s113
      %s128 = sphi 0, %s114
      %s134 = sphi 0, %s136
      %s137 = sphi 0, %s134
      %s138 = sphi 0, %s137
      %s154 = sphi 0, %s138
    $region4: #{down.1} parent=1 // loop_header_branch
      %17 = sbr.rel (%p15) target = $region8
    $region5: #{down.1} parent=1 // loop_body
      %s19 = ssub.s32 %s14, 1
      %s20 = ssub.s32 %s14, 2
      %s21 = sadd.s32 %s14, 1
      %s22 = ssub.s32 %s14, %s21
      %p23 = scmp.eq.s32.totalorder %s22, 0
      %s25 = sadd.s32 %s24, 1
      %s26 = scalar_select %p23, %s24, %s25
      %p29 = pneg %p23
      %p30 = scmp.eq.s32.totalorder %s14, 1
      %p31 = por %p29, %p30
      %p32 = scmp.ne.s32.totalorder %s24, %s27
      %p33 = scmp.eq.s32.totalorder %s14, 0
      %p34 = por %p32, %p33
      %p35 = scmp.ne.s32.totalorder %s24, %s27
      %p36 = scmp.eq.s32.totalorder %s19, 1
      %p37 = por %p35, %p36
      %p38 = scmp.ne.s32.totalorder %s27, %s28
      %p39 = scmp.eq.s32.totalorder %s19, 0
      %p40 = por %p38, %p39
      %p41 = scmp.ne.s32.totalorder %s27, %s28
      %p42 = scmp.eq.s32.totalorder %s20, 1
      %p43 = por %p41, %p42
      %p45 = scmp.ne.s32.totalorder %s28, %s44
      %p46 = scmp.eq.s32.totalorder %s20, 0
      %p47 = por %p45, %p46
      %s49 = sadd.s32 %s48, 1
      %p52 = scmp.eq.s32.totalorder %s14, 1
      %p53 = scmp.ne.s32.totalorder %s48, %s50
      %p54 = scmp.eq.s32.totalorder %s14, 0
      %p55 = por %p53, %p54
      %p56 = scmp.ne.s32.totalorder %s48, %s50
      %p57 = scmp.eq.s32.totalorder %s19, 1
      %p58 = por %p56, %p57
      %p59 = scmp.ne.s32.totalorder %s50, %s51
      %p60 = scmp.eq.s32.totalorder %s19, 0
      %p61 = por %p59, %p60
      %p62 = scmp.ne.s32.totalorder %s50, %s51
      %p63 = scmp.eq.s32.totalorder %s20, 1
      %p64 = por %p62, %p63
      %p66 = scmp.ne.s32.totalorder %s51, %s65
      %p67 = scmp.eq.s32.totalorder %s20, 0
      %p68 = por %p66, %p67
      %s70 = sadd.s32 %s69, 1
      %p73 = scmp.eq.s32.totalorder %s14, 1
      %p74 = scmp.ne.s32.totalorder %s69, %s71
      %p75 = scmp.eq.s32.totalorder %s14, 0
      %p76 = por %p74, %p75
      %p77 = scmp.ne.s32.totalorder %s69, %s71
      %p78 = scmp.eq.s32.totalorder %s19, 1
      %p79 = por %p77, %p78
      %p80 = scmp.ne.s32.totalorder %s71, %s72
      %p81 = scmp.eq.s32.totalorder %s19, 0
      %p82 = por %p80, %p81
      %p83 = scmp.ne.s32.totalorder %s71, %s72
      %p84 = scmp.eq.s32.totalorder %s20, 1
      %p85 = por %p83, %p84
      %p87 = scmp.ne.s32.totalorder %s72, %s86
      %p88 = scmp.eq.s32.totalorder %s20, 0
      %p89 = por %p87, %p88
      %s91 = sadd.s32 %s90, 1
      %p94 = scmp.eq.s32.totalorder %s14, 1
      %p95 = scmp.ne.s32.totalorder %s90, %s92
      %p96 = scmp.eq.s32.totalorder %s14, 0
      %p97 = por %p95, %p96
      %p98 = scmp.ne.s32.totalorder %s90, %s92
      %p99 = scmp.eq.s32.totalorder %s19, 1
      %p100 = por %p98, %p99
      %p101 = scmp.ne.s32.totalorder %s92, %s93
      %p102 = scmp.eq.s32.totalorder %s19, 0
      %p103 = por %p101, %p102
      %p104 = scmp.ne.s32.totalorder %s92, %s93
      %p105 = scmp.eq.s32.totalorder %s20, 1
      %p106 = por %p104, %p105
      %p108 = scmp.ne.s32.totalorder %s93, %s107
      %p109 = scmp.eq.s32.totalorder %s20, 0
      %p110 = por %p108, %p109
      %s112 = sadd.s32 %s111, 1
      %p115 = scmp.eq.s32.totalorder %s14, 1
      %p116 = scmp.ne.s32.totalorder %s111, %s113
      %p117 = scmp.eq.s32.totalorder %s14, 0
      %p118 = por %p116, %p117
      %p119 = scmp.ne.s32.totalorder %s111, %s113
      %p120 = scmp.eq.s32.totalorder %s19, 1
      %p121 = por %p119, %p120
      %p122 = scmp.ne.s32.totalorder %s113, %s114
      %p123 = scmp.eq.s32.totalorder %s19, 0
      %p124 = por %p122, %p123
      %p125 = scmp.ne.s32.totalorder %s113, %s114
      %p126 = scmp.eq.s32.totalorder %s20, 1
      %p127 = por %p125, %p126
      %p129 = scmp.ne.s32.totalorder %s114, %s128
      %p130 = scmp.eq.s32.totalorder %s20, 0
      %p131 = por %p129, %p130
      %s132 = ssub.s32 %s14, %s21
      %p133 = scmp.eq.s32.totalorder %s132, 0
      %s135 = sadd.s32 %s134, 1
      %s136 = scalar_select %p133, %s134, %s135
      %p139 = pneg %p133
      %p140 = scmp.eq.s32.totalorder %s14, 1
      %p141 = por %p139, %p140
      %p142 = scmp.ne.s32.totalorder %s134, %s137
      %p143 = scmp.eq.s32.totalorder %s14, 0
      %p144 = por %p142, %p143
      %p145 = scmp.ne.s32.totalorder %s134, %s137
      %p146 = scmp.eq.s32.totalorder %s19, 1
      %p147 = por %p145, %p146
      %p148 = scmp.ne.s32.totalorder %s137, %s138
      %p149 = scmp.eq.s32.totalorder %s19, 0
      %p150 = por %p148, %p149
      %p151 = scmp.ne.s32.totalorder %s137, %s138
      %p152 = scmp.eq.s32.totalorder %s20, 1
      %p153 = por %p151, %p152
      %p155 = scmp.ne.s32.totalorder %s138, %s154
      %p156 = scmp.eq.s32.totalorder %s20, 0
      %p157 = por %p155, %p156
      %p158 = scmp.le.s32.totalorder 1, %s14
      %p159 = scmp.lt.s32.totalorder %s14, 3
      %p160 = pnand %p158, %p159
      %p161 = pneg %p160
      // Predicated region
      $region9: #{down.1} parent=5 // pred_check
        _
      $region10: #{down.1} parent=5 // pred_check_branch
        %163 = sbr.rel (%p160) target = $region12
      $region11: #{down.1} parent=5 // pred_region
        %s164 = ssub.s32 %s14, 1
        // Predicated region
        $region13: #{down.1} parent=11 // pred_check
          %p165 = pneg %p61
        $region14: #{down.1} parent=11 // pred_check_branch
          %167 = sbr.rel (%p165) target = $region16
        $region15: #{down.1} parent=11 // pred_region
          _
        $region16: #{down.1} parent=11 // pred_fallthru
          _
        // Predicated region
        $region17: #{down.1} parent=11 // pred_check
          %p168 = pneg %p82
        $region18: #{down.1} parent=11 // pred_check_branch
          %170 = sbr.rel (%p168) target = $region20
        $region19: #{down.1} parent=11 // pred_region
          _
        $region20: #{down.1} parent=11 // pred_fallthru
          _
        // Predicated region
        $region21: #{down.1} parent=11 // pred_check
          %p171 = pneg %p103
        $region22: #{down.1} parent=11 // pred_check_branch
          %173 = sbr.rel (%p171) target = $region24
        $region23: #{down.1} parent=11 // pred_region
          _
        $region24: #{down.1} parent=11 // pred_fallthru
          _
        // Predicated region
        $region25: #{down.1} parent=11 // pred_check
          %p174 = pneg %p124
        $region26: #{down.1} parent=11 // pred_check_branch
          %176 = sbr.rel (%p174) target = $region28
        $region27: #{down.1} parent=11 // pred_region
          _
        $region28: #{down.1} parent=11 // pred_fallthru
          _
      $region12: #{down.1} parent=5 // pred_fallthru
        _
      %p177 = scmp.lt.s32.totalorder %s14, 2
      // Predicated region
      $region29: #{down.1} parent=5 // pred_check
        %p178 = pneg %p177
      $region30: #{down.1} parent=5 // pred_check_branch
        %180 = sbr.rel (%p178) target = $region32
      $region31: #{down.1} parent=5 // pred_region
        // Predicated region
        $region33: #{down.1} parent=31 // pred_check
          %p181 = pneg %p34
        $region34: #{down.1} parent=31 // pred_check_branch
          %183 = sbr.rel (%p181) target = $region36
        $region35: #{down.1} parent=31 // pred_region
          %p184 = scmp.lt.s32.totalorder %s14, 1
          %s185 = scalar_select %p184, %s14, 1
          %s186 = smul.addr %s185, 16
          %s187 = smul.addr %s186, 8
          %s188 = scalar_lea.vmem %s0, %s187
        $region36: #{down.1} parent=31 // pred_fallthru
          _
      $region32: #{down.1} parent=5 // pred_fallthru
        _
      %p189 = scmp.le.s32.totalorder 1, %s14
      %p190 = scmp.lt.s32.totalorder %s14, 3
      %p191 = pnand %p189, %p190
      %p192 = pneg %p191
      // Predicated region
      $region37: #{down.1} parent=5 // pred_check
        _
      $region38: #{down.1} parent=5 // pred_check_branch
        %194 = sbr.rel (%p191) target = $region40
      $region39: #{down.1} parent=5 // pred_region
        %s195 = ssub.s32 %s14, 1
        %p196 = scmp.lt.s32.totalorder %s19, 1
        %s197 = scalar_select %p196, %s19, 1
        %s198 = smul.addr %s197, 16
        %s199 = smul.addr %s198, 8
        %s200 = scalar_lea.vmem %s0, %s199
        %p201 = pneg %p40
        %p202 = pneg %p37
        %p203 = pneg %p61
        %p204 = pneg %p58
        %p205 = pneg %p82
        %p206 = pneg %p79
        %p207 = pneg %p103
        %p208 = pneg %p100
        %p209 = pneg %p124
        %p210 = pneg %p121
        %p211 = pneg %p150
        %p212 = pneg %p147
        %s213 = sand.u32 %s137, 1
        %s214 = scalar_lea.sflag [#allocation3], %s213
        %s215 = sand.u32 %s137, 1
        %s216 = smul.addr %s215, 64
        %s217 = scalar_lea.vmem [#allocation2], %s216
        %p218 = scmp.lt.s32.totalorder %s19, 1
        %s219 = scalar_select %p218, %s19, 1
        %s220 = smul.addr %s219, 16
        %s221 = smul.addr %s220, 8
        %s222 = scalar_lea.vmem %s0, %s221
        %v223 = vld [vmem:[%s222] sm:$0xff]
        %v224 = vld [vmem:[%s222 + $0x8] sm:$0xff]
        %v225 = vld [vmem:[%s222 + $0x10] sm:$0xff]
        %v226 = vld [vmem:[%s222 + $0x18] sm:$0xff]
        %v227 = vld [vmem:[%s222 + $0x20] sm:$0xff]
        %v228 = vld [vmem:[%s222 + $0x28] sm:$0xff]
        %v229 = vld [vmem:[%s222 + $0x30] sm:$0xff]
        %v230 = vld [vmem:[%s222 + $0x38] sm:$0xff]
        %v231 = vld [vmem:[%s222 + $0x40] sm:$0xff]
        %v232 = vld [vmem:[%s222 + $0x48] sm:$0xff]
        %v233 = vld [vmem:[%s222 + $0x50] sm:$0xff]
        %v234 = vld [vmem:[%s222 + $0x58] sm:$0xff]
        %v235 = vld [vmem:[%s222 + $0x60] sm:$0xff]
        %v236 = vld [vmem:[%s222 + $0x68] sm:$0xff]
        %v237 = vld [vmem:[%s222 + $0x70] sm:$0xff]
        %v238 = vld [vmem:[%s222 + $0x78] sm:$0xff]
        %255 = vrot.lane.b32.xlu0 %v223, 124
        %v256 = vpop.permute.xlu0 %255
        %257 = vrot.lane.b32.xlu0 %v224, 124
        %v258 = vpop.permute.xlu0 %257
        %259 = vrot.lane.b32.xlu0 %v225, 124
        %v260 = vpop.permute.xlu0 %259
        %261 = vrot.lane.b32.xlu0 %v226, 124
        %v262 = vpop.permute.xlu0 %261
        %263 = vrot.lane.b32.xlu0 %v227, 124
        %v264 = vpop.permute.xlu0 %263
        %265 = vrot.lane.b32.xlu0 %v228, 124
        %v266 = vpop.permute.xlu0 %265
        %267 = vrot.lane.b32.xlu0 %v229, 124
        %v268 = vpop.permute.xlu0 %267
        %269 = vrot.lane.b32.xlu0 %v230, 124
        %v270 = vpop.permute.xlu0 %269
        %271 = vrot.lane.b32.xlu0 %v231, 124
        %v272 = vpop.permute.xlu0 %271
        %273 = vrot.lane.b32.xlu0 %v232, 124
        %v274 = vpop.permute.xlu0 %273
        %275 = vrot.lane.b32.xlu0 %v233, 124
        %v276 = vpop.permute.xlu0 %275
        %277 = vrot.lane.b32.xlu0 %v234, 124
        %v278 = vpop.permute.xlu0 %277
        %279 = vrot.lane.b32.xlu0 %v235, 124
        %v280 = vpop.permute.xlu0 %279
        %281 = vrot.lane.b32.xlu0 %v236, 124
        %v282 = vpop.permute.xlu0 %281
        %283 = vrot.lane.b32.xlu0 %v237, 124
        %v284 = vpop.permute.xlu0 %283
        %285 = vrot.lane.b32.xlu0 %v238, 124
        %v286 = vpop.permute.xlu0 %285
        %v303 = vmax.f32 %v223, %v256
        %v304 = vmax.f32 %v224, %v258
        %v305 = vmax.f32 %v225, %v260
        %v306 = vmax.f32 %v226, %v262
        %v307 = vmax.f32 %v227, %v264
        %v308 = vmax.f32 %v228, %v266
        %v309 = vmax.f32 %v229, %v268
        %v310 = vmax.f32 %v230, %v270
        %v311 = vmax.f32 %v231, %v272
        %v312 = vmax.f32 %v232, %v274
        %v313 = vmax.f32 %v233, %v276
        %v314 = vmax.f32 %v234, %v278
        %v315 = vmax.f32 %v235, %v280
        %v316 = vmax.f32 %v236, %v282
        %v317 = vmax.f32 %v237, %v284
        %v318 = vmax.f32 %v238, %v286
        %v319 = vmax.f32 %v303, %v304
        %v320 = vmax.f32 %v305, %v306
        %v321 = vmax.f32 %v307, %v308
        %v322 = vmax.f32 %v309, %v310
        %v323 = vmax.f32 %v311, %v312
        %v324 = vmax.f32 %v313, %v314
        %v325 = vmax.f32 %v315, %v316
        %v326 = vmax.f32 %v317, %v318
        %v327 = vld [vmem:[%s1] sm:$0xff]
        %v328 = vld [vmem:[%s1 + $0x8] sm:$0xff]
        %v329 = vld [vmem:[%s1 + $0x10] sm:$0xff]
        %v330 = vld [vmem:[%s1 + $0x18] sm:$0xff]
        %v331 = vld [vmem:[%s1 + $0x20] sm:$0xf]
        %v341 = vrot.slane 0.0, 7
        %v342 = vrot.slane %v319, 7
        %v343 = vrot.slane %v320, 7
        %v344 = vrot.slane %v321, 7
        %v345 = vrot.slane %v322, 7
        %v346 = vrot.slane %v323, 7
        %v347 = vrot.slane %v324, 7
        %v348 = vrot.slane %v325, 7
        %v349 = vrot.slane %v326, 7
        %vm359 = vcmask 1040384
        %v360 = vsel %vm359, 0.0, %v341
        %v361 = vsel %vm359, 0.0, %v342
        %v362 = vsel %vm359, 0.0, %v343
        %v363 = vsel %vm359, 0.0, %v344
        %v364 = vsel %vm359, 0.0, %v345
        %v365 = vsel %vm359, 0.0, %v346
        %v366 = vsel %vm359, 0.0, %v347
        %v367 = vsel %vm359, 0.0, %v348
        %v368 = vsel %vm359, 0.0, %v349
        %v369 = vsel %vm359, %v341, 0.0
        %v370 = vsel %vm359, %v342, 0.0
        %v371 = vsel %vm359, %v343, 0.0
        %v372 = vsel %vm359, %v344, 0.0
        %v373 = vsel %vm359, %v345, 0.0
        %v374 = vsel %vm359, %v346, 0.0
        %v375 = vsel %vm359, %v347, 0.0
        %v376 = vsel %vm359, %v348, 0.0
        %v377 = vsel %vm359, %v349, 0.0
        %vm394 = vcmask 1046528
        %v395 = vrot.slane %v360, 1
        %v396 = vrot.slane %v369, 1
        %v397 = vsel %vm394, %v395, %v396
        %v398 = vrot.slane %v361, 1
        %v399 = vrot.slane %v370, 1
        %v400 = vsel %vm394, %v398, %v399
        %v401 = vrot.slane %v362, 1
        %v402 = vrot.slane %v371, 1
        %v403 = vsel %vm394, %v401, %v402
        %v404 = vrot.slane %v363, 1
        %v405 = vrot.slane %v372, 1
        %v406 = vsel %vm394, %v404, %v405
        %v407 = vrot.slane %v364, 1
        %v408 = vrot.slane %v373, 1
        %v409 = vsel %vm394, %v407, %v408
        %v410 = vrot.slane %v365, 1
        %v411 = vrot.slane %v374, 1
        %v412 = vsel %vm394, %v410, %v411
        %v413 = vrot.slane %v366, 1
        %v414 = vrot.slane %v375, 1
        %v415 = vsel %vm394, %v413, %v414
        %v416 = vrot.slane %v367, 1
        %v417 = vrot.slane %v376, 1
        %v418 = vsel %vm394, %v416, %v417
        %419 = vrot.lane.b32.xlu0 %v397, 4
        %v420 = vpop.permute.xlu0 %419
        %421 = vrot.lane.b32.xlu0 %v400, 4
        %v422 = vpop.permute.xlu0 %421
        %423 = vrot.lane.b32.xlu0 %v403, 4
        %v424 = vpop.permute.xlu0 %423
        %425 = vrot.lane.b32.xlu0 %v406, 4
        %v426 = vpop.permute.xlu0 %425
        %427 = vrot.lane.b32.xlu0 %v409, 4
        %v428 = vpop.permute.xlu0 %427
        %429 = vrot.lane.b32.xlu0 %v412, 4
        %v430 = vpop.permute.xlu0 %429
        %431 = vrot.lane.b32.xlu0 %v415, 4
        %v432 = vpop.permute.xlu0 %431
        %433 = vrot.lane.b32.xlu0 %v418, 4
        %v434 = vpop.permute.xlu0 %433
        %vm443 = vcmask 1045504
        %v444 = vrot.slane %v360, 2
        %v445 = vrot.slane %v369, 2
        %v446 = vsel %vm443, %v444, %v445
        %v447 = vrot.slane %v361, 2
        %v448 = vrot.slane %v370, 2
        %v449 = vsel %vm443, %v447, %v448
        %v450 = vrot.slane %v362, 2
        %v451 = vrot.slane %v371, 2
        %v452 = vsel %vm443, %v450, %v451
        %v453 = vrot.slane %v363, 2
        %v454 = vrot.slane %v372, 2
        %v455 = vsel %vm443, %v453, %v454
        %v456 = vrot.slane %v364, 2
        %v457 = vrot.slane %v373, 2
        %v458 = vsel %vm443, %v456, %v457
        %v459 = vrot.slane %v365, 2
        %v460 = vrot.slane %v374, 2
        %v461 = vsel %vm443, %v459, %v460
        %v462 = vrot.slane %v366, 2
        %v463 = vrot.slane %v375, 2
        %v464 = vsel %vm443, %v462, %v463
        %v465 = vrot.slane %v367, 2
        %v466 = vrot.slane %v376, 2
        %v467 = vsel %vm443, %v465, %v466
        %468 = vrot.lane.b32.xlu0 %v446, 8
        %v469 = vpop.permute.xlu0 %468
        %470 = vrot.lane.b32.xlu0 %v449, 8
        %v471 = vpop.permute.xlu0 %470
        %472 = vrot.lane.b32.xlu0 %v452, 8
        %v473 = vpop.permute.xlu0 %472
        %474 = vrot.lane.b32.xlu0 %v455, 8
        %v475 = vpop.permute.xlu0 %474
        %476 = vrot.lane.b32.xlu0 %v458, 8
        %v477 = vpop.permute.xlu0 %476
        %478 = vrot.lane.b32.xlu0 %v461, 8
        %v479 = vpop.permute.xlu0 %478
        %480 = vrot.lane.b32.xlu0 %v464, 8
        %v481 = vpop.permute.xlu0 %480
        %482 = vrot.lane.b32.xlu0 %v467, 8
        %v483 = vpop.permute.xlu0 %482
        %493 = vrot.lane.b32.xlu0 %v361, 12
        %v494 = vpop.permute.xlu0 %493
        %495 = vrot.lane.b32.xlu0 %v362, 12
        %v496 = vpop.permute.xlu0 %495
        %497 = vrot.lane.b32.xlu0 %v363, 12
        %v498 = vpop.permute.xlu0 %497
        %499 = vrot.lane.b32.xlu0 %v364, 12
        %v500 = vpop.permute.xlu0 %499
        %501 = vrot.lane.b32.xlu0 %v365, 12
        %v502 = vpop.permute.xlu0 %501
        %503 = vrot.lane.b32.xlu0 %v366, 12
        %v504 = vpop.permute.xlu0 %503
        %505 = vrot.lane.b32.xlu0 %v367, 12
        %v506 = vpop.permute.xlu0 %505
        %507 = vrot.lane.b32.xlu0 %v368, 12
        %v508 = vpop.permute.xlu0 %507
        %v518 = vrot.slane %v368, 1
        %v519 = vrot.slane %v377, 1
        %v520 = vsel %vm394, %v518, %v519
        %521 = vrot.lane.b32.xlu0 %v400, 16
        %v522 = vpop.permute.xlu0 %521
        %523 = vrot.lane.b32.xlu0 %v403, 16
        %v524 = vpop.permute.xlu0 %523
        %525 = vrot.lane.b32.xlu0 %v406, 16
        %v526 = vpop.permute.xlu0 %525
        %527 = vrot.lane.b32.xlu0 %v409, 16
        %v528 = vpop.permute.xlu0 %527
        %529 = vrot.lane.b32.xlu0 %v412, 16
        %v530 = vpop.permute.xlu0 %529
        %531 = vrot.lane.b32.xlu0 %v415, 16
        %v532 = vpop.permute.xlu0 %531
        %533 = vrot.lane.b32.xlu0 %v418, 16
        %v534 = vpop.permute.xlu0 %533
        %535 = vrot.lane.b32.xlu0 %v520, 16
        %v536 = vpop.permute.xlu0 %535
        %v545 = vrot.slane %v368, 2
        %v546 = vrot.slane %v377, 2
        %v547 = vsel %vm443, %v545, %v546
        %548 = vrot.lane.b32.xlu0 %v449, 20
        %v549 = vpop.permute.xlu0 %548
        %550 = vrot.lane.b32.xlu0 %v452, 20
        %v551 = vpop.permute.xlu0 %550
        %552 = vrot.lane.b32.xlu0 %v455, 20
        %v553 = vpop.permute.xlu0 %552
        %554 = vrot.lane.b32.xlu0 %v458, 20
        %v555 = vpop.permute.xlu0 %554
        %556 = vrot.lane.b32.xlu0 %v461, 20
        %v557 = vpop.permute.xlu0 %556
        %558 = vrot.lane.b32.xlu0 %v464, 20
        %v559 = vpop.permute.xlu0 %558
        %560 = vrot.lane.b32.xlu0 %v467, 20
        %v561 = vpop.permute.xlu0 %560
        %562 = vrot.lane.b32.xlu0 %v547, 20
        %v563 = vpop.permute.xlu0 %562
        %572 = vrot.lane.b32.xlu0 %v362, 24
        %v573 = vpop.permute.xlu0 %572
        %574 = vrot.lane.b32.xlu0 %v363, 24
        %v575 = vpop.permute.xlu0 %574
        %576 = vrot.lane.b32.xlu0 %v364, 24
        %v577 = vpop.permute.xlu0 %576
        %578 = vrot.lane.b32.xlu0 %v365, 24
        %v579 = vpop.permute.xlu0 %578
        %580 = vrot.lane.b32.xlu0 %v366, 24
        %v581 = vpop.permute.xlu0 %580
        %582 = vrot.lane.b32.xlu0 %v367, 24
        %v583 = vpop.permute.xlu0 %582
        %584 = vrot.lane.b32.xlu0 %v368, 24
        %v585 = vpop.permute.xlu0 %584
        %586 = vrot.lane.b32.xlu0 %v360, 24
        %v587 = vpop.permute.xlu0 %586
        %596 = vrot.lane.b32.xlu0 %v403, 28
        %v597 = vpop.permute.xlu0 %596
        %598 = vrot.lane.b32.xlu0 %v406, 28
        %v599 = vpop.permute.xlu0 %598
        %600 = vrot.lane.b32.xlu0 %v409, 28
        %v601 = vpop.permute.xlu0 %600
        %602 = vrot.lane.b32.xlu0 %v412, 28
        %v603 = vpop.permute.xlu0 %602
        %604 = vrot.lane.b32.xlu0 %v415, 28
        %v605 = vpop.permute.xlu0 %604
        %606 = vrot.lane.b32.xlu0 %v418, 28
        %v607 = vpop.permute.xlu0 %606
        %608 = vrot.lane.b32.xlu0 %v520, 28
        %v609 = vpop.permute.xlu0 %608
        %610 = vrot.lane.b32.xlu0 %v397, 28
        %v611 = vpop.permute.xlu0 %610
        %620 = vrot.lane.b32.xlu0 %v452, 32
        %v621 = vpop.permute.xlu0 %620
        %622 = vrot.lane.b32.xlu0 %v455, 32
        %v623 = vpop.permute.xlu0 %622
        %624 = vrot.lane.b32.xlu0 %v458, 32
        %v625 = vpop.permute.xlu0 %624
        %626 = vrot.lane.b32.xlu0 %v461, 32
        %v627 = vpop.permute.xlu0 %626
        %628 = vrot.lane.b32.xlu0 %v464, 32
        %v629 = vpop.permute.xlu0 %628
        %630 = vrot.lane.b32.xlu0 %v467, 32
        %v631 = vpop.permute.xlu0 %630
        %632 = vrot.lane.b32.xlu0 %v547, 32
        %v633 = vpop.permute.xlu0 %632
        %634 = vrot.lane.b32.xlu0 %v446, 32
        %v635 = vpop.permute.xlu0 %634
        %vm644 = vcmask 31744
        %v645 = vsel %vm644, %v360, %v420
        %v646 = vsel %vm644, %v361, %v422
        %v647 = vsel %vm644, %v362, %v424
        %v648 = vsel %vm644, %v363, %v426
        %v649 = vsel %vm644, %v364, %v428
        %v650 = vsel %vm644, %v365, %v430
        %v651 = vsel %vm644, %v366, %v432
        %v652 = vsel %vm644, %v367, %v434
        %vm653 = vcmask 64512
        %v654 = vsel %vm653, %v645, %v469
        %v655 = vsel %vm653, %v646, %v471
        %v656 = vsel %vm653, %v647, %v473
        %v657 = vsel %vm653, %v648, %v475
        %v658 = vsel %vm653, %v649, %v477
        %v659 = vsel %vm653, %v650, %v479
        %v660 = vsel %vm653, %v651, %v481
        %v661 = vsel %vm653, %v652, %v483
        %vm662 = vcmask 97280
        %v663 = vsel %vm662, %v654, %v494
        %v664 = vsel %vm662, %v655, %v496
        %v665 = vsel %vm662, %v656, %v498
        %v666 = vsel %vm662, %v657, %v500
        %v667 = vsel %vm662, %v658, %v502
        %v668 = vsel %vm662, %v659, %v504
        %v669 = vsel %vm662, %v660, %v506
        %v670 = vsel %vm662, %v661, %v508
        %vm671 = vcmask 130048
        %v672 = vsel %vm671, %v663, %v522
        %v673 = vsel %vm671, %v664, %v524
        %v674 = vsel %vm671, %v665, %v526
        %v675 = vsel %vm671, %v666, %v528
        %v676 = vsel %vm671, %v667, %v530
        %v677 = vsel %vm671, %v668, %v532
        %v678 = vsel %vm671, %v669, %v534
        %v679 = vsel %vm671, %v670, %v536
        %vm680 = vcmask 162816
        %v681 = vsel %vm680, %v672, %v549
        %v682 = vsel %vm680, %v673, %v551
        %v683 = vsel %vm680, %v674, %v553
        %v684 = vsel %vm680, %v675, %v555
        %v685 = vsel %vm680, %v676, %v557
        %v686 = vsel %vm680, %v677, %v559
        %v687 = vsel %vm680, %v678, %v561
        %v688 = vsel %vm680, %v679, %v563
        %vm689 = vcmask 195584
        %v690 = vsel %vm689, %v681, %v573
        %v691 = vsel %vm689, %v682, %v575
        %v692 = vsel %vm689, %v683, %v577
        %v693 = vsel %vm689, %v684, %v579
        %v694 = vsel %vm689, %v685, %v581
        %v695 = vsel %vm689, %v686, %v583
        %v696 = vsel %vm689, %v687, %v585
        %v697 = vsel %vm689, %v688, %v587
        %vm698 = vcmask 228352
        %v699 = vsel %vm698, %v690, %v597
        %v700 = vsel %vm698, %v691, %v599
        %v701 = vsel %vm698, %v692, %v601
        %v702 = vsel %vm698, %v693, %v603
        %v703 = vsel %vm698, %v694, %v605
        %v704 = vsel %vm698, %v695, %v607
        %v705 = vsel %vm698, %v696, %v609
        %v706 = vsel %vm698, %v697, %v611
        %vm707 = vcmask 261120
        %v708 = vsel %vm707, %v699, %v621
        %v709 = vsel %vm707, %v700, %v623
        %v710 = vsel %vm707, %v701, %v625
        %v711 = vsel %vm707, %v702, %v627
        %v712 = vsel %vm707, %v703, %v629
        %v713 = vsel %vm707, %v704, %v631
        %v714 = vsel %vm707, %v705, %v633
        %v715 = vsel %vm707, %v706, %v635
        %v716 = vld [vmem:[%s2] sm:$0x1]
        %v718 = vlaneseq
        %v719 = vshrl.u32 %v718, 7
        %v720 = vsub.s32 0, %v719
        %v721 = vrot.slane %v716, %v720
        %vm723 = vcmask 293888
        %v725 = vsel %vm723, %v708, 0
        %v728 = vsel %vm723, %v709, 0
        %v731 = vsel %vm723, %v710, 0
        %v734 = vsel %vm723, %v711, 0
        %v737 = vsel %vm723, %v712, 0
        %v740 = vsel %vm723, %v713, 0
        %v743 = vsel %vm723, %v714, 0
        %v746 = vsel %vm723, %v715, 0
        %vm748 = vcmask 1043456
        %v750 = vsel %vm748, %v331, 0
        %752 = vmatprep.subr.mxu0 0.0
        %753 = vmatpush1.msra.mxu0 0.0
        %754 = vmatprep.subr.mxu0 0.0
        %755 = vmatpush1.msra.mxu0 0.0
        %756 = vmatprep.subr.mxu0 0.0
        %757 = vmatpush1.msra.mxu0 0.0
        %758 = vmatprep.subr.mxu0 0.0
        %759 = vmatpush1.msra.mxu0 0.0
        %760 = vmatprep.subr.mxu0 0.0
        %761 = vmatpush1.msra.mxu0 0.0
        %762 = vmatprep.subr.mxu0 0.0
        %763 = vmatpush1.msra.mxu0 0.0
        %764 = vmatprep.subr.mxu0 0.0
        %765 = vmatpush1.msra.mxu0 0.0
        %766 = vmatprep.subr.mxu0 0.0
        %767 = vmatpush1.msra.mxu0 0.0
        %768 = vmatprep.subr.mxu0 0.0
        %769 = vmatpush1.msra.mxu0 0.0
        %770 = vmatprep.subr.mxu0 0.0
        %771 = vmatpush1.msra.mxu0 0.0
        %772 = vmatprep.subr.mxu0 0.0
        %773 = vmatpush1.msra.mxu0 0.0
        %774 = vmatprep.subr.mxu0 0.0
        %775 = vmatpush1.msra.mxu0 %v750
        %776 = vmatprep.subr.mxu0 0.0
        %777 = vmatpush1.msra.mxu0 %v330
        %778 = vmatprep.subr.mxu0 0.0
        %779 = vmatpush1.msra.mxu0 %v329
        %780 = vmatprep.subr.mxu0 0.0
        %781 = vmatpush1.msra.mxu0 %v328
        %782 = vmatprep.subr.mxu0 0.0
        %783 = vmatpush1.msra.mxu0 %v327
        %784 = vmatprep.subr.mxu0 0.0
        %785 = vmatpush2.msra.mxu0 0.0
        %786 = vmatprep.subr.mxu0 0.0
        %787 = vmatpush2.msra.mxu0 0.0
        %788 = vmatprep.subr.mxu0 0.0
        %789 = vmatpush2.msra.mxu0 0.0
        %790 = vmatprep.subr.mxu0 0.0
        %791 = vmatpush2.msra.mxu0 0.0
        %792 = vmatprep.subr.mxu0 0.0
        %793 = vmatpush2.msra.mxu0 0.0
        %794 = vmatprep.subr.mxu0 0.0
        %795 = vmatpush2.msra.mxu0 0.0
        %796 = vmatprep.subr.mxu0 0.0
        %797 = vmatpush2.msra.mxu0 0.0
        %798 = vmatprep.subr.mxu0 0.0
        %799 = vmatpush2.msra.mxu0 0.0
        %800 = vmatprep.subr.mxu0 0.0
        %801 = vmatpush2.msra.mxu0 0.0
        %802 = vmatprep.subr.mxu0 0.0
        %803 = vmatpush2.msra.mxu0 0.0
        %804 = vmatprep.subr.mxu0 0.0
        %805 = vmatpush2.msra.mxu0 0.0
        %806 = vmatprep.subr.mxu0 0.0
        %807 = vmatpush2.msra.mxu0 0.0
        %808 = vmatprep.subr.mxu0 0.0
        %809 = vmatpush2.msra.mxu0 0.0
        %810 = vmatprep.subr.mxu0 0.0
        %811 = vmatpush2.msra.mxu0 0.0
        %812 = vmatprep.subr.mxu0 0.0
        %813 = vmatpush2.msra.mxu0 0.0
        %814 = vmatprep.subr.mxu0 0.0
        %815 = vmatpush2.msra.mxu0 0.0
        %816 = vmatprep.mubr.f32.mxu0 0.0
        %817 = vmatmul.mubr.f32.gmra.mxu0 %v725
        %v818 = vpop.f32.mrf.mxu0
        %v819 = vadd.f32 %v721, %v818
        %v820 = vpop.f32.mrf.mxu0
        %821 = vmatprep.mubr.f32.mxu0 0.0
        %822 = vmatmul.mubr.f32.gmra.mxu0 %v728
        %v823 = vpop.f32.mrf.mxu0
        %v824 = vadd.f32 %v721, %v823
        %v825 = vpop.f32.mrf.mxu0
        %826 = vmatprep.mubr.f32.mxu0 0.0
        %827 = vmatmul.mubr.f32.gmra.mxu0 %v731
        %v828 = vpop.f32.mrf.mxu0
        %v829 = vadd.f32 %v721, %v828
        %v830 = vpop.f32.mrf.mxu0
        %831 = vmatprep.mubr.f32.mxu0 0.0
        %832 = vmatmul.mubr.f32.gmra.mxu0 %v734
        %v833 = vpop.f32.mrf.mxu0
        %v834 = vadd.f32 %v721, %v833
        %v835 = vpop.f32.mrf.mxu0
        %836 = vmatprep.mubr.f32.mxu0 0.0
        %837 = vmatmul.mubr.f32.gmra.mxu0 %v737
        %v838 = vpop.f32.mrf.mxu0
        %v839 = vadd.f32 %v721, %v838
        %v840 = vpop.f32.mrf.mxu0
        %841 = vmatprep.mubr.f32.mxu0 0.0
        %842 = vmatmul.mubr.f32.gmra.mxu0 %v740
        %v843 = vpop.f32.mrf.mxu0
        %v844 = vadd.f32 %v721, %v843
        %v845 = vpop.f32.mrf.mxu0
        %846 = vmatprep.mubr.f32.mxu0 0.0
        %847 = vmatmul.mubr.f32.gmra.mxu0 %v743
        %v848 = vpop.f32.mrf.mxu0
        %v849 = vadd.f32 %v721, %v848
        %v850 = vpop.f32.mrf.mxu0
        %851 = vmatprep.mubr.f32.mxu0 0.0
        %852 = vmatmul.mubr.f32.gmra.mxu0 %v746
        %v853 = vpop.f32.mrf.mxu0
        %v854 = vadd.f32 %v721, %v853
        %v855 = vpop.f32.mrf.mxu0
        %856 = vdwg.mxu0
        %v857 = vmax.f32 %v819, 0.0
        %v858 = vmax.f32 %v824, 0.0
        %v859 = vmax.f32 %v829, 0.0
        %v860 = vmax.f32 %v834, 0.0
        %v861 = vmax.f32 %v839, 0.0
        %v862 = vmax.f32 %v844, 0.0
        %v863 = vmax.f32 %v849, 0.0
        %v864 = vmax.f32 %v854, 0.0
        %v865 = vld [vmem:[%s3] sm:$0xff]
        %v866 = vld [vmem:[%s3 + $0x8] sm:$0xff]
        %v867 = vld [vmem:[%s3 + $0x10] sm:$0xff]
        %v868 = vld [vmem:[%s3 + $0x18] sm:$0xff]
        %v869 = vld [vmem:[%s3 + $0x20] sm:$0xff]
        %v870 = vld [vmem:[%s3 + $0x28] sm:$0xff]
        %v871 = vld [vmem:[%s3 + $0x30] sm:$0xff]
        %v872 = vld [vmem:[%s3 + $0x38] sm:$0xff]
        %v873 = vld [vmem:[%s3 + $0x40] sm:$0xff]
        %v882 = vrot.slane %v857, 7
        %v883 = vrot.slane %v858, 7
        %v884 = vrot.slane %v859, 7
        %v885 = vrot.slane %v860, 7
        %v886 = vrot.slane %v861, 7
        %v887 = vrot.slane %v862, 7
        %v888 = vrot.slane %v863, 7
        %v889 = vrot.slane %v864, 7
        %v898 = vsel %vm359, 0.0, %v882
        %v899 = vsel %vm359, 0.0, %v883
        %v900 = vsel %vm359, 0.0, %v884
        %v901 = vsel %vm359, 0.0, %v885
        %v902 = vsel %vm359, 0.0, %v886
        %v903 = vsel %vm359, 0.0, %v887
        %v904 = vsel %vm359, 0.0, %v888
        %v905 = vsel %vm359, 0.0, %v889
        %v906 = vsel %vm359, %v882, 0.0
        %v907 = vsel %vm359, %v883, 0.0
        %v908 = vsel %vm359, %v884, 0.0
        %v909 = vsel %vm359, %v885, 0.0
        %v910 = vsel %vm359, %v886, 0.0
        %v911 = vsel %vm359, %v887, 0.0
        %v912 = vsel %vm359, %v888, 0.0
        %v913 = vsel %vm359, %v889, 0.0
        %v928 = vrot.slane %v898, 1
        %v929 = vrot.slane %v906, 1
        %v930 = vsel %vm394, %v928, %v929
        %v931 = vrot.slane %v899, 1
        %v932 = vrot.slane %v907, 1
        %v933 = vsel %vm394, %v931, %v932
        %v934 = vrot.slane %v900, 1
        %v935 = vrot.slane %v908, 1
        %v936 = vsel %vm394, %v934, %v935
        %v937 = vrot.slane %v901, 1
        %v938 = vrot.slane %v909, 1
        %v939 = vsel %vm394, %v937, %v938
        %v940 = vrot.slane %v902, 1
        %v941 = vrot.slane %v910, 1
        %v942 = vsel %vm394, %v940, %v941
        %v943 = vrot.slane %v903, 1
        %v944 = vrot.slane %v911, 1
        %v945 = vsel %vm394, %v943, %v944
        %v946 = vrot.slane %v904, 1
        %v947 = vrot.slane %v912, 1
        %v948 = vsel %vm394, %v946, %v947
        %949 = vrot.lane.b32.xlu0 %v397, 8
        %v950 = vpop.permute.xlu0 %949
        %951 = vrot.lane.b32.xlu0 %v930, 8
        %v952 = vpop.permute.xlu0 %951
        %953 = vrot.lane.b32.xlu0 %v933, 8
        %v954 = vpop.permute.xlu0 %953
        %955 = vrot.lane.b32.xlu0 %v936, 8
        %v956 = vpop.permute.xlu0 %955
        %957 = vrot.lane.b32.xlu0 %v939, 8
        %v958 = vpop.permute.xlu0 %957
        %959 = vrot.lane.b32.xlu0 %v942, 8
        %v960 = vpop.permute.xlu0 %959
        %961 = vrot.lane.b32.xlu0 %v945, 8
        %v962 = vpop.permute.xlu0 %961
        %963 = vrot.lane.b32.xlu0 %v948, 8
        %v964 = vpop.permute.xlu0 %963
        %v973 = vrot.slane %v898, 2
        %v974 = vrot.slane %v906, 2
        %v975 = vsel %vm443, %v973, %v974
        %v976 = vrot.slane %v899, 2
        %v977 = vrot.slane %v907, 2
        %v978 = vsel %vm443, %v976, %v977
        %v979 = vrot.slane %v900, 2
        %v980 = vrot.slane %v908, 2
        %v981 = vsel %vm443, %v979, %v980
        %v982 = vrot.slane %v901, 2
        %v983 = vrot.slane %v909, 2
        %v984 = vsel %vm443, %v982, %v983
        %v985 = vrot.slane %v902, 2
        %v986 = vrot.slane %v910, 2
        %v987 = vsel %vm443, %v985, %v986
        %v988 = vrot.slane %v903, 2
        %v989 = vrot.slane %v911, 2
        %v990 = vsel %vm443, %v988, %v989
        %v991 = vrot.slane %v904, 2
        %v992 = vrot.slane %v912, 2
        %v993 = vsel %vm443, %v991, %v992
        %994 = vrot.lane.b32.xlu0 %v446, 16
        %v995 = vpop.permute.xlu0 %994
        %996 = vrot.lane.b32.xlu0 %v975, 16
        %v997 = vpop.permute.xlu0 %996
        %998 = vrot.lane.b32.xlu0 %v978, 16
        %v999 = vpop.permute.xlu0 %998
        %1000 = vrot.lane.b32.xlu0 %v981, 16
        %v1001 = vpop.permute.xlu0 %1000
        %1002 = vrot.lane.b32.xlu0 %v984, 16
        %v1003 = vpop.permute.xlu0 %1002
        %1004 = vrot.lane.b32.xlu0 %v987, 16
        %v1005 = vpop.permute.xlu0 %1004
        %1006 = vrot.lane.b32.xlu0 %v990, 16
        %v1007 = vpop.permute.xlu0 %1006
        %1008 = vrot.lane.b32.xlu0 %v993, 16
        %v1009 = vpop.permute.xlu0 %1008
        %1019 = vrot.lane.b32.xlu0 %v898, 24
        %v1020 = vpop.permute.xlu0 %1019
        %1021 = vrot.lane.b32.xlu0 %v899, 24
        %v1022 = vpop.permute.xlu0 %1021
        %1023 = vrot.lane.b32.xlu0 %v900, 24
        %v1024 = vpop.permute.xlu0 %1023
        %1025 = vrot.lane.b32.xlu0 %v901, 24
        %v1026 = vpop.permute.xlu0 %1025
        %1027 = vrot.lane.b32.xlu0 %v902, 24
        %v1028 = vpop.permute.xlu0 %1027
        %1029 = vrot.lane.b32.xlu0 %v903, 24
        %v1030 = vpop.permute.xlu0 %1029
        %1031 = vrot.lane.b32.xlu0 %v904, 24
        %v1032 = vpop.permute.xlu0 %1031
        %1033 = vrot.lane.b32.xlu0 %v905, 24
        %v1034 = vpop.permute.xlu0 %1033
        %v1044 = vrot.slane %v905, 1
        %v1045 = vrot.slane %v913, 1
        %v1046 = vsel %vm394, %v1044, %v1045
        %1047 = vrot.lane.b32.xlu0 %v930, 32
        %v1048 = vpop.permute.xlu0 %1047
        %1049 = vrot.lane.b32.xlu0 %v933, 32
        %v1050 = vpop.permute.xlu0 %1049
        %1051 = vrot.lane.b32.xlu0 %v936, 32
        %v1052 = vpop.permute.xlu0 %1051
        %1053 = vrot.lane.b32.xlu0 %v939, 32
        %v1054 = vpop.permute.xlu0 %1053
        %1055 = vrot.lane.b32.xlu0 %v942, 32
        %v1056 = vpop.permute.xlu0 %1055
        %1057 = vrot.lane.b32.xlu0 %v945, 32
        %v1058 = vpop.permute.xlu0 %1057
        %1059 = vrot.lane.b32.xlu0 %v948, 32
        %v1060 = vpop.permute.xlu0 %1059
        %1061 = vrot.lane.b32.xlu0 %v1046, 32
        %v1062 = vpop.permute.xlu0 %1061
        %v1071 = vrot.slane %v905, 2
        %v1072 = vrot.slane %v913, 2
        %v1073 = vsel %vm443, %v1071, %v1072
        %1074 = vrot.lane.b32.xlu0 %v975, 40
        %v1075 = vpop.permute.xlu0 %1074
        %1076 = vrot.lane.b32.xlu0 %v978, 40
        %v1077 = vpop.permute.xlu0 %1076
        %1078 = vrot.lane.b32.xlu0 %v981, 40
        %v1079 = vpop.permute.xlu0 %1078
        %1080 = vrot.lane.b32.xlu0 %v984, 40
        %v1081 = vpop.permute.xlu0 %1080
        %1082 = vrot.lane.b32.xlu0 %v987, 40
        %v1083 = vpop.permute.xlu0 %1082
        %1084 = vrot.lane.b32.xlu0 %v990, 40
        %v1085 = vpop.permute.xlu0 %1084
        %1086 = vrot.lane.b32.xlu0 %v993, 40
        %v1087 = vpop.permute.xlu0 %1086
        %1088 = vrot.lane.b32.xlu0 %v1073, 40
        %v1089 = vpop.permute.xlu0 %1088
        %1098 = vrot.lane.b32.xlu0 %v899, 48
        %v1099 = vpop.permute.xlu0 %1098
        %1100 = vrot.lane.b32.xlu0 %v900, 48
        %v1101 = vpop.permute.xlu0 %1100
        %1102 = vrot.lane.b32.xlu0 %v901, 48
        %v1103 = vpop.permute.xlu0 %1102
        %1104 = vrot.lane.b32.xlu0 %v902, 48
        %v1105 = vpop.permute.xlu0 %1104
        %1106 = vrot.lane.b32.xlu0 %v903, 48
        %v1107 = vpop.permute.xlu0 %1106
        %1108 = vrot.lane.b32.xlu0 %v904, 48
        %v1109 = vpop.permute.xlu0 %1108
        %1110 = vrot.lane.b32.xlu0 %v905, 48
        %v1111 = vpop.permute.xlu0 %1110
        %1112 = vrot.lane.b32.xlu0 %v360, 48
        %v1113 = vpop.permute.xlu0 %1112
        %1122 = vrot.lane.b32.xlu0 %v933, 56
        %v1123 = vpop.permute.xlu0 %1122
        %1124 = vrot.lane.b32.xlu0 %v936, 56
        %v1125 = vpop.permute.xlu0 %1124
        %1126 = vrot.lane.b32.xlu0 %v939, 56
        %v1127 = vpop.permute.xlu0 %1126
        %1128 = vrot.lane.b32.xlu0 %v942, 56
        %v1129 = vpop.permute.xlu0 %1128
        %1130 = vrot.lane.b32.xlu0 %v945, 56
        %v1131 = vpop.permute.xlu0 %1130
        %1132 = vrot.lane.b32.xlu0 %v948, 56
        %v1133 = vpop.permute.xlu0 %1132
        %1134 = vrot.lane.b32.xlu0 %v1046, 56
        %v1135 = vpop.permute.xlu0 %1134
        %1136 = vrot.lane.b32.xlu0 %v397, 56
        %v1137 = vpop.permute.xlu0 %1136
        %1146 = vrot.lane.b32.xlu0 %v978, 64
        %v1147 = vpop.permute.xlu0 %1146
        %1148 = vrot.lane.b32.xlu0 %v981, 64
        %v1149 = vpop.permute.xlu0 %1148
        %1150 = vrot.lane.b32.xlu0 %v984, 64
        %v1151 = vpop.permute.xlu0 %1150
        %1152 = vrot.lane.b32.xlu0 %v987, 64
        %v1153 = vpop.permute.xlu0 %1152
        %1154 = vrot.lane.b32.xlu0 %v990, 64
        %v1155 = vpop.permute.xlu0 %1154
        %1156 = vrot.lane.b32.xlu0 %v993, 64
        %v1157 = vpop.permute.xlu0 %1156
        %1158 = vrot.lane.b32.xlu0 %v1073, 64
        %v1159 = vpop.permute.xlu0 %1158
        %1160 = vrot.lane.b32.xlu0 %v446, 64
        %v1161 = vpop.permute.xlu0 %1160
        %v1170 = vsel %vm653, %v360, %v950
        %v1171 = vsel %vm653, %v898, %v952
        %v1172 = vsel %vm653, %v899, %v954
        %v1173 = vsel %vm653, %v900, %v956
        %v1174 = vsel %vm653, %v901, %v958
        %v1175 = vsel %vm653, %v902, %v960
        %v1176 = vsel %vm653, %v903, %v962
        %v1177 = vsel %vm653, %v904, %v964
        %v1178 = vsel %vm671, %v1170, %v995
        %v1179 = vsel %vm671, %v1171, %v997
        %v1180 = vsel %vm671, %v1172, %v999
        %v1181 = vsel %vm671, %v1173, %v1001
        %v1182 = vsel %vm671, %v1174, %v1003
        %v1183 = vsel %vm671, %v1175, %v1005
        %v1184 = vsel %vm671, %v1176, %v1007
        %v1185 = vsel %vm671, %v1177, %v1009
        %v1186 = vsel %vm689, %v1178, %v1020
        %v1187 = vsel %vm689, %v1179, %v1022
        %v1188 = vsel %vm689, %v1180, %v1024
        %v1189 = vsel %vm689, %v1181, %v1026
        %v1190 = vsel %vm689, %v1182, %v1028
        %v1191 = vsel %vm689, %v1183, %v1030
        %v1192 = vsel %vm689, %v1184, %v1032
        %v1193 = vsel %vm689, %v1185, %v1034
        %v1194 = vsel %vm707, %v1186, %v1048
        %v1195 = vsel %vm707, %v1187, %v1050
        %v1196 = vsel %vm707, %v1188, %v1052
        %v1197 = vsel %vm707, %v1189, %v1054
        %v1198 = vsel %vm707, %v1190, %v1056
        %v1199 = vsel %vm707, %v1191, %v1058
        %v1200 = vsel %vm707, %v1192, %v1060
        %v1201 = vsel %vm707, %v1193, %v1062
        %vm1202 = vcmask 326656
        %v1203 = vsel %vm1202, %v1194, %v1075
        %v1204 = vsel %vm1202, %v1195, %v1077
        %v1205 = vsel %vm1202, %v1196, %v1079
        %v1206 = vsel %vm1202, %v1197, %v1081
        %v1207 = vsel %vm1202, %v1198, %v1083
        %v1208 = vsel %vm1202, %v1199, %v1085
        %v1209 = vsel %vm1202, %v1200, %v1087
        %v1210 = vsel %vm1202, %v1201, %v1089
        %vm1211 = vcmask 392192
        %v1212 = vsel %vm1211, %v1203, %v1099
        %v1213 = vsel %vm1211, %v1204, %v1101
        %v1214 = vsel %vm1211, %v1205, %v1103
        %v1215 = vsel %vm1211, %v1206, %v1105
        %v1216 = vsel %vm1211, %v1207, %v1107
        %v1217 = vsel %vm1211, %v1208, %v1109
        %v1218 = vsel %vm1211, %v1209, %v1111
        %v1219 = vsel %vm1211, %v1210, %v1113
        %vm1220 = vcmask 457728
        %v1221 = vsel %vm1220, %v1212, %v1123
        %v1222 = vsel %vm1220, %v1213, %v1125
        %v1223 = vsel %vm1220, %v1214, %v1127
        %v1224 = vsel %vm1220, %v1215, %v1129
        %v1225 = vsel %vm1220, %v1216, %v1131
        %v1226 = vsel %vm1220, %v1217, %v1133
        %v1227 = vsel %vm1220, %v1218, %v1135
        %v1228 = vsel %vm1220, %v1219, %v1137
        %vm1229 = vcmask 523264
        %v1230 = vsel %vm1229, %v1221, %v1147
        %v1231 = vsel %vm1229, %v1222, %v1149
        %v1232 = vsel %vm1229, %v1223, %v1151
        %v1233 = vsel %vm1229, %v1224, %v1153
        %v1234 = vsel %vm1229, %v1225, %v1155
        %v1235 = vsel %vm1229, %v1226, %v1157
        %v1236 = vsel %vm1229, %v1227, %v1159
        %v1237 = vsel %vm1229, %v1228, %v1161
        %v1238 = vld [vmem:[%s4] sm:$0x1]
        %v1240 = vlaneseq
        %v1241 = vshrl.u32 %v1240, 7
        %v1242 = vsub.s32 0, %v1241
        %v1243 = vrot.slane %v1238, %v1242
        %vm1245 = vcmask 588800
        %v1247 = vsel %vm1245, %v1230, 0
        %v1250 = vsel %vm1245, %v1231, 0
        %v1253 = vsel %vm1245, %v1232, 0
        %v1256 = vsel %vm1245, %v1233, 0
        %v1259 = vsel %vm1245, %v1234, 0
        %v1262 = vsel %vm1245, %v1235, 0
        %v1265 = vsel %vm1245, %v1236, 0
        %v1268 = vsel %vm1245, %v1237, 0
        %1270 = vmatprep.subr.mxu0 0.0
        %1271 = vmatpush1.msra.mxu0 0.0
        %1272 = vmatprep.subr.mxu0 0.0
        %1273 = vmatpush1.msra.mxu0 0.0
        %1274 = vmatprep.subr.mxu0 0.0
        %1275 = vmatpush1.msra.mxu0 0.0
        %1276 = vmatprep.subr.mxu0 0.0
        %1277 = vmatpush1.msra.mxu0 0.0
        %1278 = vmatprep.subr.mxu0 0.0
        %1279 = vmatpush1.msra.mxu0 0.0
        %1280 = vmatprep.subr.mxu0 0.0
        %1281 = vmatpush1.msra.mxu0 0.0
        %1282 = vmatprep.subr.mxu0 0.0
        %1283 = vmatpush1.msra.mxu0 0.0
        %1284 = vmatprep.subr.mxu0 0.0
        %1285 = vmatpush1.msra.mxu0 %v873
        %1286 = vmatprep.subr.mxu0 0.0
        %1287 = vmatpush1.msra.mxu0 %v872
        %1288 = vmatprep.subr.mxu0 0.0
        %1289 = vmatpush1.msra.mxu0 %v871
        %1290 = vmatprep.subr.mxu0 0.0
        %1291 = vmatpush1.msra.mxu0 %v870
        %1292 = vmatprep.subr.mxu0 0.0
        %1293 = vmatpush1.msra.mxu0 %v869
        %1294 = vmatprep.subr.mxu0 0.0
        %1295 = vmatpush1.msra.mxu0 %v868
        %1296 = vmatprep.subr.mxu0 0.0
        %1297 = vmatpush1.msra.mxu0 %v867
        %1298 = vmatprep.subr.mxu0 0.0
        %1299 = vmatpush1.msra.mxu0 %v866
        %1300 = vmatprep.subr.mxu0 0.0
        %1301 = vmatpush1.msra.mxu0 %v865
        %1302 = vmatprep.subr.mxu0 0.0
        %1303 = vmatpush2.msra.mxu0 0.0
        %1304 = vmatprep.subr.mxu0 0.0
        %1305 = vmatpush2.msra.mxu0 0.0
        %1306 = vmatprep.subr.mxu0 0.0
        %1307 = vmatpush2.msra.mxu0 0.0
        %1308 = vmatprep.subr.mxu0 0.0
        %1309 = vmatpush2.msra.mxu0 0.0
        %1310 = vmatprep.subr.mxu0 0.0
        %1311 = vmatpush2.msra.mxu0 0.0
        %1312 = vmatprep.subr.mxu0 0.0
        %1313 = vmatpush2.msra.mxu0 0.0
        %1314 = vmatprep.subr.mxu0 0.0
        %1315 = vmatpush2.msra.mxu0 0.0
        %1316 = vmatprep.subr.mxu0 0.0
        %1317 = vmatpush2.msra.mxu0 0.0
        %1318 = vmatprep.subr.mxu0 0.0
        %1319 = vmatpush2.msra.mxu0 0.0
        %1320 = vmatprep.subr.mxu0 0.0
        %1321 = vmatpush2.msra.mxu0 0.0
        %1322 = vmatprep.subr.mxu0 0.0
        %1323 = vmatpush2.msra.mxu0 0.0
        %1324 = vmatprep.subr.mxu0 0.0
        %1325 = vmatpush2.msra.mxu0 0.0
        %1326 = vmatprep.subr.mxu0 0.0
        %1327 = vmatpush2.msra.mxu0 0.0
        %1328 = vmatprep.subr.mxu0 0.0
        %1329 = vmatpush2.msra.mxu0 0.0
        %1330 = vmatprep.subr.mxu0 0.0
        %1331 = vmatpush2.msra.mxu0 0.0
        %1332 = vmatprep.subr.mxu0 0.0
        %1333 = vmatpush2.msra.mxu0 0.0
        %1334 = vmatprep.mubr.f32.mxu0 0.0
        %1335 = vmatmul.mubr.f32.gmra.mxu0 %v1247
        %v1336 = vpop.f32.mrf.mxu0
        %v1337 = vadd.f32 %v1243, %v1336
        %v1338 = vpop.f32.mrf.mxu0
        %1339 = vmatprep.mubr.f32.mxu0 0.0
        %1340 = vmatmul.mubr.f32.gmra.mxu0 %v1250
        %v1341 = vpop.f32.mrf.mxu0
        %v1342 = vadd.f32 %v1243, %v1341
        %v1343 = vpop.f32.mrf.mxu0
        %1344 = vmatprep.mubr.f32.mxu0 0.0
        %1345 = vmatmul.mubr.f32.gmra.mxu0 %v1253
        %v1346 = vpop.f32.mrf.mxu0
        %v1347 = vadd.f32 %v1243, %v1346
        %v1348 = vpop.f32.mrf.mxu0
        %1349 = vmatprep.mubr.f32.mxu0 0.0
        %1350 = vmatmul.mubr.f32.gmra.mxu0 %v1256
        %v1351 = vpop.f32.mrf.mxu0
        %v1352 = vadd.f32 %v1243, %v1351
        %v1353 = vpop.f32.mrf.mxu0
        %1354 = vmatprep.mubr.f32.mxu0 0.0
        %1355 = vmatmul.mubr.f32.gmra.mxu0 %v1259
        %v1356 = vpop.f32.mrf.mxu0
        %v1357 = vadd.f32 %v1243, %v1356
        %v1358 = vpop.f32.mrf.mxu0
        %1359 = vmatprep.mubr.f32.mxu0 0.0
        %1360 = vmatmul.mubr.f32.gmra.mxu0 %v1262
        %v1361 = vpop.f32.mrf.mxu0
        %v1362 = vadd.f32 %v1243, %v1361
        %v1363 = vpop.f32.mrf.mxu0
        %1364 = vmatprep.mubr.f32.mxu0 0.0
        %1365 = vmatmul.mubr.f32.gmra.mxu0 %v1265
        %v1366 = vpop.f32.mrf.mxu0
        %v1367 = vadd.f32 %v1243, %v1366
        %v1368 = vpop.f32.mrf.mxu0
        %1369 = vmatprep.mubr.f32.mxu0 0.0
        %1370 = vmatmul.mubr.f32.gmra.mxu0 %v1268
        %v1371 = vpop.f32.mrf.mxu0
        %v1372 = vadd.f32 %v1243, %v1371
        %v1373 = vpop.f32.mrf.mxu0
        %1374 = vdwg.mxu0
        %v1375 = vmax.f32 %v1337, 0.0
        %v1376 = vmax.f32 %v1342, 0.0
        %v1377 = vmax.f32 %v1347, 0.0
        %v1378 = vmax.f32 %v1352, 0.0
        %v1379 = vmax.f32 %v1357, 0.0
        %v1380 = vmax.f32 %v1362, 0.0
        %v1381 = vmax.f32 %v1367, 0.0
        %v1382 = vmax.f32 %v1372, 0.0
        %1383 = vst.msk [vmem:[%s217] sm:$0xff] %vm653, %v1375
        %1384 = vst.msk [vmem:[%s217 + $0x8] sm:$0xff] %vm653, %v1376
        %1385 = vst.msk [vmem:[%s217 + $0x10] sm:$0xff] %vm653, %v1377
        %1386 = vst.msk [vmem:[%s217 + $0x18] sm:$0xff] %vm653, %v1378
        %1387 = vst.msk [vmem:[%s217 + $0x20] sm:$0xff] %vm653, %v1379
        %1388 = vst.msk [vmem:[%s217 + $0x28] sm:$0xff] %vm653, %v1380
        %1389 = vst.msk [vmem:[%s217 + $0x30] sm:$0xff] %vm653, %v1381
        %1390 = vst.msk [vmem:[%s217 + $0x38] sm:$0xff] %vm653, %v1382
        %s1391 = sand.u32 %s137, 1
        %s1392 = scalar_lea.sflag [#allocation3], %s1391
        %s1393 = sand.u32 %s137, 1
        %s1394 = smul.addr %s1393, 64
        %s1395 = scalar_lea.vmem [#allocation2], %s1394
        // Predicated region
        $region41: #{down.1} parent=39 // pred_check
          %p1396 = pneg %p147
        $region42: #{down.1} parent=39 // pred_check_branch
          %1398 = sbr.rel (%p1396) target = $region44
        $region43: #{down.1} parent=39 // pred_region
          %s1400 = ssub.s32 1024, 1024
          %1401 = vsyncadd %s1392, %s1400
          %s1402 = smul.addr %s19, 8
          %s1403 = smul.addr %s1402, 128
          %s1404 = scalar_lea.hbm %s5, %s1403
          %s1405 = sshll.u32 %s1395, 4
          %s1406 = int_to_ptr.vmem [resolvable:$true] %s1405
          %1411 = dma.vmem_to_hbm [thread:$0]  %s1406, 1024, %s1404, %s1392, 128, 128, 8
        $region44: #{down.1} parent=39 // pred_fallthru
          _
      $region40: #{down.1} parent=5 // pred_fallthru
        _
      %p1412 = scmp.le.s32.totalorder 2, %s14
      // Predicated region
      $region45: #{down.1} parent=5 // pred_check
        %p1413 = pneg %p1412
      $region46: #{down.1} parent=5 // pred_check_branch
        %1415 = sbr.rel (%p1413) target = $region48
      $region47: #{down.1} parent=5 // pred_region
        %s1416 = ssub.s32 %s14, 2
        // Predicated region
        $region49: #{down.1} parent=47 // pred_check
          %p1417 = pneg %p153
        $region50: #{down.1} parent=47 // pred_check_branch
          %1419 = sbr.rel (%p1417) target = $region52
        $region51: #{down.1} parent=47 // pred_region
          %s1420 = sand.u32 %s138, 1
          %s1421 = scalar_lea.sflag [#allocation3], %s1420
          %s1422 = sand.u32 %s138, 1
          %s1423 = smul.addr %s1422, 64
          %s1424 = scalar_lea.vmem [#allocation2], %s1423
          %1425 = dma.done %s1421, 1024
        $region52: #{down.1} parent=47 // pred_fallthru
          _
      $region48: #{down.1} parent=5 // pred_fallthru
        _
    $region6: #{down.1} parent=1 // loop_footer
      %s18 = sadd.s32 1, %s14
    $region7: #{down.1} parent=1 // loop_footer_branch
      %13 = sbr.rel target = $region3
    $region8: #{down.1} parent=1 // loop_exit
      _
    %1426 = vsyncpa [#allocation3], 1
    %s1427 = scalar_lea.sflag [#allocation3], 1
    %1428 = vsyncpa %s1427, 1

</llo_original>
